<compile_context>
chip_gen: v7x
topology: tpu7x:2x2x1
jax: 0.10.0
libtpu: 0.0.40
codegen_flags: <defaults>
</compile_context>

<pallas_src>
import functools

import jax
import jax.numpy as jnp
from jax.experimental import pallas as pl
from jax.experimental.pallas import tpu as pltpu

LANES = 128
SUBLANES = 8                       # f32 vreg sublane count
MAX_TILE_ROWS = 4096               # 4096 * 128 * 4B = 2 MiB per f32 input block


def _mse_partial_kernel(x_ref, y_ref, sq_ref, t_ref, *,
                        tile_rows, n_rows, use_square, mask_tail):
    i = pl.program_id(0)

    x = x_ref[...].astype(jnp.float32)
    y = y_ref[...].astype(jnp.float32)
    if use_square:
        x = x * x
    d = x - y
    dd = d * d

    if mask_tail:
        # Rows past n_rows (only possible on the ragged last tile) hold
        # out-of-bounds garbage; zero their contribution to both sums.
        row = i * tile_rows + jax.lax.broadcasted_iota(
            jnp.int32, (tile_rows, LANES), 0)
        valid = row < n_rows
        dd = jnp.where(valid, dd, 0.0)
        y = jnp.where(valid, y, 0.0)

    # Tile-aligned reduction: group rows into (8,128) vreg tiles and add them
    # (pure VALU, no cross-lane XLU work).  Output block stays (8,128)-aligned.
    groups = tile_rows // SUBLANES
    sq_ref[...] = dd.reshape(groups, SUBLANES, LANES).sum(axis=0)
    t_ref[...] = y.reshape(groups, SUBLANES, LANES).sum(axis=0)


def mean_square_loss(x, y, *, y_norm=True, size_average=True,
                     use_square=False, max_tile_rows=MAX_TILE_ROWS):
    assert x.shape == y.shape, "input and target must have identical shapes"
    assert max_tile_rows % SUBLANES == 0
    n = int(x.size)
    assert n > 0, "empty input"

    xf = jnp.ravel(x)          # keep native dtype; kernel upcasts on the VPU
    yf = jnp.ravel(y)

    # Pad with zeros only up to one (8,128) register tile so the flat array
    # reshapes to a lane-dense (rows, 128) slab.  Zero padding contributes 0
    # to both reduction sums (also when use_square squares the zeros).
    align = SUBLANES * LANES
    pad = (-n) % align
    if pad:
        xf = jnp.pad(xf, (0, pad))
        yf = jnp.pad(yf, (0, pad))

    n_rows = (n + pad) // LANES                    # multiple of 8
    tile_rows = min(n_rows, max_tile_rows)         # multiple of 8
    n_tiles = pl.cdiv(n_rows, tile_rows)
    mask_tail = (n_rows % tile_rows) != 0          # ragged last tile?

    x2 = xf.reshape(n_rows, LANES)
    y2 = yf.reshape(n_rows, LANES)

    kernel = functools.partial(
        _mse_partial_kernel,
        tile_rows=tile_rows,
        n_rows=n_rows,
        use_square=use_square,
        mask_tail=mask_tail,
    )

    part_sq, part_t = pl.pallas_call(
        kernel,
        out_shape=(
            jax.ShapeDtypeStruct((n_tiles * SUBLANES, LANES), jnp.float32),
            jax.ShapeDtypeStruct((n_tiles * SUBLANES, LANES), jnp.float32),
        ),
        grid_spec=pltpu.PrefetchScalarGridSpec(
            num_scalar_prefetch=0,
            grid=(n_tiles,),
            in_specs=[
                pl.BlockSpec((tile_rows, LANES), lambda i: (i, 0)),
                pl.BlockSpec((tile_rows, LANES), lambda i: (i, 0)),
            ],
            out_specs=[
                pl.BlockSpec((SUBLANES, LANES), lambda i: (i, 0)),
                pl.BlockSpec((SUBLANES, LANES), lambda i: (i, 0)),
            ],
        ),
        compiler_params=pltpu.CompilerParams(
            # Tiles are independent -> shard across TensorCores on v7x.
            dimension_semantics=("parallel",),
        ),
    )(x2, y2)

    # Tiny scalar epilogue (combines per-tile / per-core partials).
    loss = jnp.sum(part_sq)
    if y_norm:
        loss = loss / jnp.maximum(jnp.float32(1.0), jnp.sum(part_t))
    if size_average:
        loss = loss / jnp.float32(n)
    return loss


def _reference(x, y, *, y_norm=True, size_average=True, use_square=False):
    x = x.astype(jnp.float32)
    y = y.astype(jnp.float32)
    if use_square:
        x = x * x
    loss = (x - y) ** 2
    if y_norm:
        loss = loss / jnp.maximum(1.0, jnp.sum(y))
    return jnp.mean(loss) if size_average else jnp.sum(loss)


if __name__ == "__main__":
    key = jax.random.PRNGKey(0)
    k1, k2 = jax.random.split(key)

    # NCHW inputs, as the PyTorch module would typically receive.
    x = jax.random.normal(k1, (2, 4, 16, 16), dtype=jnp.float32)
    t = jax.random.normal(k2, (2, 4, 16, 16), dtype=jnp.float32)

    # Default config (y_norm=True, size_average=True, use_square=False).
    out = jax.block_until_ready(mean_square_loss(x, t))
    ref = _reference(x, t)
    assert jnp.allclose(out, ref, rtol=1e-4, atol=1e-6), (out, ref)

    # Exercise the other static branches (use_square / sum / no y_norm).
    out2 = jax.block_until_ready(
        mean_square_loss(x, t, use_square=True, size_average=False))
    ref2 = _reference(x, t, use_square=True, size_average=False)
    assert jnp.allclose(out2, ref2, rtol=1e-4, atol=1e-6), (out2, ref2)

    out4 = jax.block_until_ready(mean_square_loss(x, t, y_norm=False))
    ref4 = _reference(x, t, y_norm=False)
    assert jnp.allclose(out4, ref4, rtol=1e-4, atol=1e-6), (out4, ref4)

    # Exercise a multi-tile grid with a ragged, masked last tile.
    x3 = jax.random.normal(k1, (2, 4, 16, 24), dtype=jnp.float32)
    t3 = jax.random.normal(k2, (2, 4, 16, 24), dtype=jnp.float32)
    out3 = jax.block_until_ready(mean_square_loss(x3, t3, max_tile_rows=16))
    ref3 = _reference(x3, t3)
    assert jnp.allclose(out3, ref3, rtol=1e-4, atol=1e-6), (out3, ref3)

    print("KERNEL_OK")
</pallas_src>

<mosaic_0001>
module attributes {stable_mosaic.version = 11 : i64} {
  func.func @_mse_partial_kernel(%arg0: i32, %arg1: memref<16x128xf32, #tpu.memory_space<vmem>>, %arg2: memref<16x128xf32, #tpu.memory_space<vmem>>, %arg3: memref<8x128xf32, #tpu.memory_space<vmem>>, %arg4: memref<8x128xf32, #tpu.memory_space<vmem>>) attributes {dimension_semantics = [#tpu.dimension_semantics<parallel>], iteration_bounds = array<i64: 1>, scalar_prefetch = 0 : i64, scratch_operands = 0 : i64, tpu.core_type = #tpu.core_type<tc>, window_params = [{transform_indices = @transform_0, window_bounds = array<i64: 16, 128>}, {transform_indices = @transform_1, window_bounds = array<i64: 16, 128>}, {transform_indices = @transform_2, window_bounds = array<i64: 8, 128>}, {transform_indices = @transform_3, window_bounds = array<i64: 8, 128>}]} {
    %c0 = arith.constant 0 : index
    %c0_0 = arith.constant 0 : index
    %0 = vector.load %arg1[%c0, %c0_0] : memref<16x128xf32, #tpu.memory_space<vmem>>, vector<16x128xf32>
    %c0_1 = arith.constant 0 : index
    %c0_2 = arith.constant 0 : index
    %1 = vector.load %arg2[%c0_1, %c0_2] : memref<16x128xf32, #tpu.memory_space<vmem>>, vector<16x128xf32>
    %2 = arith.subf %0, %1 : vector<16x128xf32>
    %3 = arith.mulf %2, %2 : vector<16x128xf32>
    %4 = vector.shape_cast %3 : vector<16x128xf32> to vector<2x8x128xf32>
    %cst = arith.constant dense<0.000000e+00> : vector<8x128xf32>
    %5 = vector.multi_reduction <add>, %4, %cst [0] : vector<2x8x128xf32> to vector<8x128xf32>
    %c0_3 = arith.constant 0 : index
    %c0_4 = arith.constant 0 : index
    %6 = vector.load %arg3[%c0_3, %c0_4] : memref<8x128xf32, #tpu.memory_space<vmem>>, vector<8x128xf32>
    tpu.vector_store %arg3[%c0_3, %c0_4], %5 {strides = array<i32>} : memref<8x128xf32, #tpu.memory_space<vmem>>, vector<8x128xf32>,
    %7 = vector.shape_cast %1 : vector<16x128xf32> to vector<2x8x128xf32>
    %cst_5 = arith.constant dense<0.000000e+00> : vector<8x128xf32>
    %8 = vector.multi_reduction <add>, %7, %cst_5 [0] : vector<2x8x128xf32> to vector<8x128xf32>
    %c0_6 = arith.constant 0 : index
    %c0_7 = arith.constant 0 : index
    %9 = vector.load %arg4[%c0_6, %c0_7] : memref<8x128xf32, #tpu.memory_space<vmem>>, vector<8x128xf32>
    tpu.vector_store %arg4[%c0_6, %c0_7], %8 {strides = array<i32>} : memref<8x128xf32, #tpu.memory_space<vmem>>, vector<8x128xf32>,
    return
  }
  func.func @transform_0(%arg0: i32) -> (i32, i32) {
    %c0_i32 = arith.constant 0 : i32
    %c0_i32_0 = arith.constant 0 : i32
    return %arg0, %c0_i32 : i32, i32
  }
  func.func @transform_1(%arg0: i32) -> (i32, i32) {
    %c0_i32 = arith.constant 0 : i32
    %c0_i32_0 = arith.constant 0 : i32
    return %arg0, %c0_i32 : i32, i32
  }
  func.func @transform_2(%arg0: i32) -> (i32, i32) {
    %c0_i32 = arith.constant 0 : i32
    %c0_i32_0 = arith.constant 0 : i32
    return %arg0, %c0_i32 : i32, i32
  }
  func.func @transform_3(%arg0: i32) -> (i32, i32) {
    %c0_i32 = arith.constant 0 : i32
    %c0_i32_0 = arith.constant 0 : i32
    return %arg0, %c0_i32 : i32, i32
  }
}

</mosaic_0001>

<llo_original>
// kernel: tpu_custom_call.1
$region0: #{tpu_custom_call.1}
  #allocation0 [shape = 'u32[]', space=smem, size = 0x4, offset = 0x4, fixed_abs, tag = 'smem constant byte address 0x4 - core index']
  #allocation1 [shape = 'u32[144,128]{1,0:T(1,128)}', space=vmem, size = 0x12000, scoped, tag = 'internal scratch']
  %s0 = inlined_call_operand.hbm [shape: f32[16,128], index: 0, kind: input, shape index: {}]
  %s1 = inlined_call_operand.hbm [shape: f32[16,128], index: 1, kind: input, shape index: {}]
  %s2 = inlined_call_operand.hbm [shape: f32[8,128], index: 2, kind: output, shape index: {0}]
  %s3 = inlined_call_operand.hbm [shape: f32[8,128], index: 3, kind: output, shape index: {1}]
  %4 = xla_tuple %s2, %s3
  %s5 = sld [smem:[#allocation0]]
  $region34: #{tpu_custom_call.1} parent=0
    _
  %s7 = ssub.s32 1, %s5
  %s8 = scalar_select 0, %s7, %s5
  $region1: #{tpu_custom_call.1} parent=0
    #allocation2 [shape = 'u8[8192]{0}', space=vmem, size = 0x2000, scoped, tag = 'input window, operand 0, single buffered']
    #allocation3 [shape = 's32[1]{0}', space=sflag, size = 0x4, scoped, tag = 'scoped memory for tpu_custom_call.1']
    #allocation4 [shape = 's32[1]{0}', space=sflag, size = 0x4, scoped, tag = 'scoped memory for tpu_custom_call.1']
    #allocation5 [shape = 'u8[8192]{0}', space=vmem, size = 0x2000, scoped, tag = 'input window, operand 1, single buffered']
    #allocation6 [shape = 's32[1]{0}', space=sflag, size = 0x4, scoped, tag = 'scoped memory for tpu_custom_call.1']
    #allocation7 [shape = 'u8[4096]{0}', space=vmem, size = 0x1000, scoped, tag = 'output window, operand 0, single buffered']
    #allocation8 [shape = 'u8[4096]{0}', space=vmem, size = 0x1000, scoped, tag = 'output window, operand 1, single buffered']
    #allocation9 [shape = 's32[1]{0}', space=sflag, size = 0x4, scoped, tag = 'scoped memory for tpu_custom_call.1']
    %9 = vsyncpa [#allocation3], 0
    %10 = vsyncpa [#allocation6], 0
    %11 = vsyncpa [#allocation4], 0
    %12 = vsyncpa [#allocation9], 0
    // Predicated region
    $region2: #{tpu_custom_call.1} parent=1 // pred_check
      _
    $region3: #{tpu_custom_call.1} parent=1 // pred_check_branch
      %14 = sbr.rel (0) target = $region5
    $region4: #{tpu_custom_call.1} parent=1 // pred_region
      %s16 = ssub.s32 256, 256
      %17 = vsyncadd [#allocation3], %s16
      %s18 = sshll.u32 [#allocation2], 4
      %s19 = int_to_ptr.vmem [resolvable:$true] %s18
      %24 = dma.hbm_to_vmem [thread:$0]  %s0, 256, %s19, [#allocation3], 128, 128, 8
    $region5: #{tpu_custom_call.1} parent=1 // pred_fallthru
      _
    // Predicated region
    $region6: #{tpu_custom_call.1} parent=1 // pred_check
      _
    $region7: #{tpu_custom_call.1} parent=1 // pred_check_branch
      %26 = sbr.rel (0) target = $region9
    $region8: #{tpu_custom_call.1} parent=1 // pred_region
      %s28 = ssub.s32 256, 256
      %29 = vsyncadd [#allocation6], %s28
      %s30 = sshll.u32 [#allocation5], 4
      %s31 = int_to_ptr.vmem [resolvable:$true] %s30
      %36 = dma.hbm_to_vmem [thread:$0]  %s1, 256, %s31, [#allocation6], 128, 128, 8
    $region9: #{tpu_custom_call.1} parent=1 // pred_fallthru
      _
    // Predicated region
    $region10: #{tpu_custom_call.1} parent=1 // pred_check
      _
    $region11: #{tpu_custom_call.1} parent=1 // pred_check_branch
      %38 = sbr.rel (0) target = $region13
    $region12: #{tpu_custom_call.1} parent=1 // pred_region
      %39 = dma.done [#allocation3], 256
    $region13: #{tpu_custom_call.1} parent=1 // pred_fallthru
      _
    // Predicated region
    $region14: #{tpu_custom_call.1} parent=1 // pred_check
      _
    $region15: #{tpu_custom_call.1} parent=1 // pred_check_branch
      %41 = sbr.rel (0) target = $region17
    $region16: #{tpu_custom_call.1} parent=1 // pred_region
      %42 = dma.done [#allocation6], 256
    $region17: #{tpu_custom_call.1} parent=1 // pred_fallthru
      _
    %v43 = vld [vmem:[#allocation2] sm:$0xff]
    %v44 = vld [vmem:[#allocation2 + $0x8] sm:$0xff]
    %v45 = vld [vmem:[#allocation5] sm:$0xff]
    %v46 = vld [vmem:[#allocation5 + $0x8] sm:$0xff]
    %v47 = vsub.f32 %v43, %v45
    %v48 = vsub.f32 %v44, %v46
    %v49 = vmul.f32 %v47, %v47
    %v50 = vmul.f32 %v48, %v48
    %v51 = vadd.f32 %v49, %v50
    %52 = vst [vmem:[#allocation7] sm:$0xff] %v51
    %v53 = vadd.f32 %v45, %v46
    %54 = vst [vmem:[#allocation8] sm:$0xff] %v53
    // Predicated region
    $region18: #{tpu_custom_call.1} parent=1 // pred_check
      _
    $region19: #{tpu_custom_call.1} parent=1 // pred_check_branch
      %56 = sbr.rel (0) target = $region21
    $region20: #{tpu_custom_call.1} parent=1 // pred_region
      %s58 = ssub.s32 128, 128
      %59 = vsyncadd [#allocation4], %s58
      %s61 = sshll.u32 [#allocation7], 4
      %s62 = int_to_ptr.vmem [resolvable:$true] %s61
      %64 = dma.vmem_to_hbm [thread:$0]  %s62, 128, %s2, [#allocation4]
    $region21: #{tpu_custom_call.1} parent=1 // pred_fallthru
      _
    // Predicated region
    $region22: #{tpu_custom_call.1} parent=1 // pred_check
      _
    $region23: #{tpu_custom_call.1} parent=1 // pred_check_branch
      %66 = sbr.rel (0) target = $region25
    $region24: #{tpu_custom_call.1} parent=1 // pred_region
      %s68 = ssub.s32 128, 128
      %69 = vsyncadd [#allocation9], %s68
      %s71 = sshll.u32 [#allocation8], 4
      %s72 = int_to_ptr.vmem [resolvable:$true] %s71
      %74 = dma.vmem_to_hbm [thread:$0]  %s72, 128, %s3, [#allocation9]
    $region25: #{tpu_custom_call.1} parent=1 // pred_fallthru
      _
    // Predicated region
    $region26: #{tpu_custom_call.1} parent=1 // pred_check
      _
    $region27: #{tpu_custom_call.1} parent=1 // pred_check_branch
      %76 = sbr.rel (0) target = $region29
    $region28: #{tpu_custom_call.1} parent=1 // pred_region
      %77 = dma.done [#allocation4], 128
    $region29: #{tpu_custom_call.1} parent=1 // pred_fallthru
      _
    // Predicated region
    $region30: #{tpu_custom_call.1} parent=1 // pred_check
      _
    $region31: #{tpu_custom_call.1} parent=1 // pred_check_branch
      %79 = sbr.rel (0) target = $region33
    $region32: #{tpu_custom_call.1} parent=1 // pred_region
      %80 = dma.done [#allocation9], 128
    $region33: #{tpu_custom_call.1} parent=1 // pred_fallthru
      _
    %81 = vsyncpa [#allocation3], 1
    %82 = vsyncpa [#allocation6], 1
    %83 = vsyncpa [#allocation4], 1
    %84 = vsyncpa [#allocation9], 1

</llo_original>
